<compile_context>
chip_gen: v5e
topology: v5e:2x2
jax: 0.10.0
libtpu: 0.0.40
codegen_flags: <defaults>
</compile_context>

<pallas_src>
import numpy as np
import jax
import jax.numpy as jnp
from jax import lax
from jax.experimental import pallas as pl
from jax.experimental.pallas import tpu as pltpu


def calculate_normalized_laplacian_np(adj: np.ndarray) -> np.ndarray:
    """Dense numpy equivalent of the scipy-sparse reference implementation."""
    adj = adj + np.eye(adj.shape[0], dtype=np.float64)
    d = adj.sum(axis=1)
    d_inv_sqrt = np.power(d, -0.5)
    d_inv_sqrt[np.isinf(d_inv_sqrt)] = 0.0
    d_mat_inv_sqrt = np.diag(d_inv_sqrt)
    # adj.dot(D^-1/2).T.dot(D^-1/2)  ==  D^-1/2 @ adj.T @ D^-1/2
    normalized = (adj @ d_mat_inv_sqrt).T @ d_mat_inv_sqrt
    return normalized.astype(np.float32)


def _gcn_kernel(x_ref, adj_t_ref, w_t_ref, b_ref, o_ref):
    # x_ref:     (bt, N, D) f32 VMEM
    # adj_t_ref: (N, N)     f32 VMEM  -- A_norm^T (grid-invariant)
    # w_t_ref:   (H, D)     f32 VMEM  -- W^T, lane-major (grid-invariant)
    # b_ref:     (H,)       f32 SMEM  -- bias scalars
    # o_ref:     (H, bt, N) f32 VMEM
    bt, n, d = x_ref.shape
    h = w_t_ref.shape[0]

    x = x_ref[...]
    adj_t = adj_t_ref[...]

    if h == 1:
        # Module default (qkv_hid=1): feature transform on VPU + XLU lane
        # reduce; keeps the MXU for the aggregation matmul only.
        cols = [jnp.sum(x * w_t_ref[...].reshape(1, 1, d), axis=-1)]   # (bt, N)
    else:
        # General H: one (bt*N, D) @ (D, H) MXU matmul (contract on the last
        # axis of both operands since W is passed transposed).
        # Note: the reshape below is free only when N is sublane-aligned (8).
        xw = lax.dot_general(
            x.reshape(bt * n, d), w_t_ref[...],
            dimension_numbers=(((1,), (1,)), ((), ())),
            preferred_element_type=jnp.float32)                        # (bt*N, H)
        xw3 = xw.reshape(bt, n, h)
        cols = [xw3[:, :, hh] for hh in range(h)]

    for hh in range(h):  # static loop; h == 1 for the reference module
        # Aggregation as ONE 2-D MXU matmul per output channel:
        #   y[b, j] = sum_m A_norm[j, m] * xw[b, m] == (xw @ A_norm^T)[b, j]
        y = jnp.dot(cols[hh], adj_t, preferred_element_type=jnp.float32)
        o_ref[hh] = (y + b_ref[hh]).astype(o_ref.dtype)


def _pick_bt_tile(bt_total: int, n: int, d: int, h: int):
    """Choose the B*T tile (grid = BT // tile) and an optional VMEM limit.

    Budgets the double-buffered x and out blocks plus the grid-invariant
    adj^T / W^T blocks; derives capacity from the running chip (v5e/v6e:
    128 MiB, v7x: 64 MiB per TensorCore) but stays inside the smallest
    scoped-VMEM default (16 MiB on v5e) unless more is genuinely needed.
    """
    try:
        info = pltpu.get_tpu_info()
        vmem_cap = int(getattr(info, "vmem_capacity_bytes", 64 * 1024 * 1024))
    except Exception:
        vmem_cap = 64 * 1024 * 1024   # conservative: v7x per-core physical VMEM

    budget = min(vmem_cap // 2, 12 * 1024 * 1024)

    def block_bytes(tile):
        x_blk = tile * n * d * 4            # input block
        o_blk = h * tile * n * 4            # output block
        inv = (n * n + h * d) * 4           # grid-invariant adj^T / W^T blocks
        return 2 * (x_blk + o_blk + inv)    # everything is double-buffered

    divisors = [t for t in range(1, bt_total + 1) if bt_total % t == 0]
    # Valid tiles keep the output block's second-minor dim sublane-aligned
    # whenever the grid has more than one step (block dim full or % 8 == 0).
    fitting = [t for t in divisors
               if block_bytes(t) <= budget and (t == bt_total or t % 8 == 0)]
    if fitting:
        tile = max(fitting)
    else:
        tile = min(t for t in divisors if t == bt_total or t % 8 == 0)

    # Split only when per-block traffic amortises the ~0.35us per-grid-step
    # overhead; that is also when v7x's two TensorCores each get useful work.
    # At the default tiny shapes this keeps grid=(1,).
    min_split_bytes = 2 * 1024 * 1024
    if tile == bt_total and bt_total % 2 == 0:
        half = bt_total // 2
        if half % 8 == 0 and half * n * d * 4 >= min_split_bytes:
            tile = half

    need = block_bytes(tile) + (1 << 20)    # margin for compiler scratch
    vmem_limit = None
    if need > (12 * 1024 * 1024):
        vmem_limit = int(min(need, vmem_cap - (4 << 20)))
    return tile, vmem_limit


def gcn_forward(inputs, norm_adj, weight, bias, bt_tile=None):
    """inputs: (B, T, N, D); norm_adj: (N, N); weight: (D, H); bias: (H,)."""
    B, T, N, D = inputs.shape
    H = weight.shape[1]
    BT = B * T

    vmem_limit = None
    if bt_tile is None:
        bt_tile, vmem_limit = _pick_bt_tile(BT, N, D, H)
    assert BT % bt_tile == 0, (BT, bt_tile)
    num_blocks = BT // bt_tile

    # Layout plumbing outside the kernel (cheap, fused by XLA):
    x_bt = inputs.astype(jnp.float32).reshape(BT, N, D)      # free reshape
    adj_t = jnp.asarray(norm_adj, jnp.float32).T             # explicit A^T (no symmetry assumption)
    w_t = jnp.asarray(weight, jnp.float32).T                 # (H, D): lane-major weight rows
    b = jnp.asarray(bias, jnp.float32).reshape(H)            # SMEM scalars

    cp_kwargs = dict(dimension_semantics=("parallel",))
    if vmem_limit is not None:
        cp_kwargs["vmem_limit_bytes"] = vmem_limit

    out_hbn = pl.pallas_call(
        _gcn_kernel,
        out_shape=jax.ShapeDtypeStruct((H, BT, N), jnp.float32),
        grid=(num_blocks,),
        in_specs=[
            pl.BlockSpec((bt_tile, N, D), lambda i: (i, 0, 0)),
            pl.BlockSpec((N, N), lambda i: (0, 0)),              # grid-invariant
            pl.BlockSpec((H, D), lambda i: (0, 0)),              # grid-invariant
            pl.BlockSpec(memory_space=pltpu.MemorySpace.SMEM),   # bias scalars
        ],
        out_specs=pl.BlockSpec((H, bt_tile, N), lambda i: (0, i, 0)),
        compiler_params=pltpu.CompilerParams(**cp_kwargs),
    )(x_bt, adj_t, w_t, b)

    # (H, BT, N) -> (B, T, N, H): cheap plumbing on the (small) output.
    return jnp.transpose(out_hbn, (1, 2, 0)).reshape(B, T, N, H)


def gcn_reference(inputs, norm_adj, weight, bias):
    """Pure-JAX reference mirroring the PyTorch forward exactly."""
    B, T, N, D = inputs.shape
    x0 = jnp.transpose(inputs, (2, 3, 0, 1)).reshape(N, -1)
    x1 = norm_adj @ x0
    x1 = x1.reshape(N, D, B, T)
    x1 = jnp.transpose(x1, (2, 3, 0, 1)).reshape(-1, D)
    x1 = x1 @ weight + bias
    return x1.reshape(B, T, N, weight.shape[1])


if __name__ == "__main__":
    # Small shapes consistent with the module's forward: (B, T, N, D)
    B, T, N, D = 2, 8, 16, 32
    hid = 1  # qkv_hid default

    key = jax.random.PRNGKey(0)
    k_x, k_adj, k_w = jax.random.split(key, 3)

    # Deterministic synthetic symmetric adjacency (0/1)
    adj_rand = jax.random.uniform(k_adj, (N, N))
    adj_np = np.asarray((adj_rand > 0.7).astype(jnp.float32))
    adj_np = np.maximum(adj_np, adj_np.T)
    np.fill_diagonal(adj_np, 0.0)
    norm_adj = jnp.asarray(calculate_normalized_laplacian_np(adj_np))

    # Parameters: xavier_normal_ for weight_0 (D, hid), constant 0 bias
    xavier_std = float(np.sqrt(2.0 / (D + hid)))
    weight = jax.random.normal(k_w, (D, hid), dtype=jnp.float32) * xavier_std
    bias = jnp.zeros((hid,), dtype=jnp.float32)

    inputs = jax.random.normal(k_x, (B, T, N, D), dtype=jnp.float32)

    out = jax.jit(gcn_forward)(inputs, norm_adj, weight, bias)
    out = jax.block_until_ready(out)

    ref = gcn_reference(inputs, norm_adj, weight, bias)
    assert out.shape == (B, T, N, hid)
    np.testing.assert_allclose(np.asarray(out), np.asarray(ref),
                               rtol=1e-5, atol=1e-5)
    print("KERNEL_OK")
</pallas_src>

<mosaic_0001>
module attributes {stable_mosaic.version = 11 : i64} {
  func.func @_gcn_kernel(%arg0: i32, %arg1: memref<16x16x32xf32, #tpu.memory_space<vmem>>, %arg2: memref<16x16xf32, #tpu.memory_space<vmem>>, %arg3: memref<1x32xf32, #tpu.memory_space<vmem>>, %arg4: memref<1xf32, #tpu.memory_space<smem>>, %arg5: memref<1x16x16xf32, #tpu.memory_space<vmem>>) attributes {dimension_semantics = [#tpu.dimension_semantics<parallel>], iteration_bounds = array<i64: 1>, scalar_prefetch = 0 : i64, scratch_operands = 0 : i64, tpu.core_type = #tpu.core_type<tc>, window_params = [{transform_indices = @transform_0, window_bounds = array<i64: 16, 16, 32>}, {pipeline_mode = #tpu.pipeline_mode<synchronous>, transform_indices = @transform_1, window_bounds = array<i64: 16, 16>}, {pipeline_mode = #tpu.pipeline_mode<synchronous>, transform_indices = @transform_2, window_bounds = array<i64: 1, 32>}, {transform_indices = @transform_3, window_bounds = array<i64: 1>}, {transform_indices = @transform_4, window_bounds = array<i64: 1, 16, 16>}]} {
    %c0 = arith.constant 0 : index
    %c0_0 = arith.constant 0 : index
    %c0_1 = arith.constant 0 : index
    %0 = vector.load %arg1[%c0, %c0_0, %c0_1] : memref<16x16x32xf32, #tpu.memory_space<vmem>>, vector<16x16x32xf32>
    %c0_2 = arith.constant 0 : index
    %c0_3 = arith.constant 0 : index
    %1 = vector.load %arg2[%c0_2, %c0_3] : memref<16x16xf32, #tpu.memory_space<vmem>>, vector<16x16xf32>
    %c0_4 = arith.constant 0 : index
    %c0_5 = arith.constant 0 : index
    %2 = vector.load %arg3[%c0_4, %c0_5] : memref<1x32xf32, #tpu.memory_space<vmem>>, vector<1x32xf32>
    %3 = vector.shape_cast %2 : vector<1x32xf32> to vector<1x1x32xf32>
    %4 = vector.broadcast %3 : vector<1x1x32xf32> to vector<16x16x32xf32>
    %5 = arith.mulf %0, %4 : vector<16x16x32xf32>
    %cst = arith.constant dense<0.000000e+00> : vector<16x16xf32>
    %6 = vector.multi_reduction <add>, %5, %cst [2] : vector<16x16x32xf32> to vector<16x16xf32>
    %cst_6 = arith.constant dense<0.000000e+00> : vector<16x16xf32>
    %7 = tpu.matmul %6, %1, %cst_6 {dimension_numbers = #tpu.dot_dimension_numbers<[1], [0], [0], [1], [0, 0, 1, 1], [], []>} : vector<16x16xf32>, vector<16x16xf32>, vector<16x16xf32> -> vector<16x16xf32>
    %c0_7 = arith.constant 0 : index
    %8 = memref.load %arg4[%c0_7] : memref<1xf32, #tpu.memory_space<smem>>
    %9 = vector.broadcast %8 : f32 to vector<16x16xf32>
    %10 = arith.addf %7, %9 : vector<16x16xf32>
    %c0_8 = arith.constant 0 : index
    %c0_9 = arith.constant 0 : index
    %c0_10 = arith.constant 0 : index
    %11 = vector.load %arg5[%c0_8, %c0_9, %c0_10] : memref<1x16x16xf32, #tpu.memory_space<vmem>>, vector<1x16x16xf32>
    %12 = vector.shape_cast %11 : vector<1x16x16xf32> to vector<16x16xf32>
    %13 = vector.shape_cast %10 : vector<16x16xf32> to vector<1x16x16xf32>
    tpu.vector_store %arg5[%c0_8, %c0_9, %c0_10], %13 {strides = array<i32>} : memref<1x16x16xf32, #tpu.memory_space<vmem>>, vector<1x16x16xf32>,
    return
  }
  func.func @transform_0(%arg0: i32) -> (i32, i32, i32) {
    %c0_i32 = arith.constant 0 : i32
    %c0_i32_0 = arith.constant 0 : i32
    %c0_i32_1 = arith.constant 0 : i32
    return %arg0, %c0_i32, %c0_i32_0 : i32, i32, i32
  }
  func.func @transform_1(%arg0: i32) -> (i32, i32) {
    %c0_i32 = arith.constant 0 : i32
    %c0_i32_0 = arith.constant 0 : i32
    %c0_i32_1 = arith.constant 0 : i32
    return %c0_i32, %c0_i32_0 : i32, i32
  }
  func.func @transform_2(%arg0: i32) -> (i32, i32) {
    %c0_i32 = arith.constant 0 : i32
    %c0_i32_0 = arith.constant 0 : i32
    %c0_i32_1 = arith.constant 0 : i32
    return %c0_i32, %c0_i32_0 : i32, i32
  }
  func.func @transform_3(%arg0: i32) -> i32 {
    %c0_i32 = arith.constant 0 : i32
    %c0_i32_0 = arith.constant 0 : i32
    return %c0_i32 : i32
  }
  func.func @transform_4(%arg0: i32) -> (i32, i32, i32) {
    %c0_i32 = arith.constant 0 : i32
    %c0_i32_0 = arith.constant 0 : i32
    %c0_i32_1 = arith.constant 0 : i32
    return %c0_i32, %arg0, %c0_i32_0 : i32, i32, i32
  }
}

</mosaic_0001>

<llo_original>
// kernel: gcn_forward.1
$region0: #{gcn_forward.1}
  #allocation0 [shape = 'u32[]', space=smem, size = 0x4, offset = 0x4, fixed_abs, tag = 'smem constant byte address 0x4 - core index']
  #allocation1 [shape = 'u32[72,128]{1,0:T(1,128)}', space=vmem, size = 0x9000, scoped, tag = 'internal scratch']
  #allocation2 [shape = 'f32[1]{0:T(128)S(6)}', space=smem, size = 0x200, scoped, tag = 'scoped memory for gcn_forward.1']
  %s0 = inlined_call_operand.hbm [shape: f32[16,16,32], index: 0, kind: input, shape index: {}]
  %s1 = inlined_call_operand.vmem [shape: f32[16,16], index: 1, kind: input, shape index: {}]
  %s2 = inlined_call_operand.vmem [shape: f32[1,32], index: 2, kind: input, shape index: {}]
  %s3 = inlined_call_operand.<no memory space> [shape: f32[1], index: 3, kind: input, shape index: {}]
  %s4 = inlined_call_operand.hbm [shape: f32[1,16,16], index: 4, kind: output, shape index: {}]
  %s5 = sld [smem:[#allocation0]]
  $region30: #{gcn_forward.1} parent=0
    _
  %s7 = ssub.s32 1, %s5
  %s8 = scalar_select 0, %s7, %s5
  %9 = sst [smem:[#allocation2]] %s3
  $region1: #{gcn_forward.1} parent=0
    #allocation3 [shape = 'u8[131072]{0}', space=vmem, size = 0x20000, scoped, tag = 'input window, operand 0, single buffered']
    #allocation4 [shape = 's32[1]{0}', space=sflag, size = 0x4, scoped, tag = 'scoped memory for gcn_forward.1']
    #allocation5 [shape = 's32[1]{0}', space=sflag, size = 0x4, scoped, tag = 'scoped memory for gcn_forward.1']
    #allocation6 [shape = 'u8[8192]{0}', space=vmem, size = 0x2000, scoped, tag = 'output window, operand 0, single buffered']
    %10 = vsyncpa [#allocation4], 0
    %11 = vsyncpa [#allocation5], 0
    // Predicated region
    $region2: #{gcn_forward.1} parent=1 // pred_check
      _
    $region3: #{gcn_forward.1} parent=1 // pred_check_branch
      %13 = sbr.rel (0) target = $region5
    $region4: #{gcn_forward.1} parent=1 // pred_region
      %15 = vsyncadd [#allocation4], 0
      %s16 = sshll.u32 %s0, 4
      %s17 = int_to_ptr.hbm [resolvable:$true] %s16
      %s18 = sshll.u32 [#allocation3], 4
      %s19 = int_to_ptr.vmem [resolvable:$true] %s18
      %24 = dma.hbm_to_vmem [thread:$0]  %s17, 4096, %s19, [#allocation4], 128, 128, 8
    $region5: #{gcn_forward.1} parent=1 // pred_fallthru
      _
    // Predicated region
    $region6: #{gcn_forward.1} parent=1 // pred_check
      _
    $region7: #{gcn_forward.1} parent=1 // pred_check_branch
      %26 = sbr.rel (0) target = $region9
    $region8: #{gcn_forward.1} parent=1 // pred_region
      _
    $region9: #{gcn_forward.1} parent=1 // pred_fallthru
      _
    // Predicated region
    $region10: #{gcn_forward.1} parent=1 // pred_check
      _
    $region11: #{gcn_forward.1} parent=1 // pred_check_branch
      %28 = sbr.rel (0) target = $region13
    $region12: #{gcn_forward.1} parent=1 // pred_region
      _
    $region13: #{gcn_forward.1} parent=1 // pred_fallthru
      _
    // Predicated region
    $region14: #{gcn_forward.1} parent=1 // pred_check
      _
    $region15: #{gcn_forward.1} parent=1 // pred_check_branch
      %30 = sbr.rel (0) target = $region17
    $region16: #{gcn_forward.1} parent=1 // pred_region
      _
    $region17: #{gcn_forward.1} parent=1 // pred_fallthru
      _
    // Predicated region
    $region18: #{gcn_forward.1} parent=1 // pred_check
      _
    $region19: #{gcn_forward.1} parent=1 // pred_check_branch
      %32 = sbr.rel (0) target = $region21
    $region20: #{gcn_forward.1} parent=1 // pred_region
      %34 = dma.done [#allocation4], 4096
    $region21: #{gcn_forward.1} parent=1 // pred_fallthru
      _
    %v35 = vld [vmem:[#allocation3] sm:$0xff]
    %v36 = vld [vmem:[#allocation3 + $0x8] sm:$0xff]
    %v37 = vld [vmem:[#allocation3 + $0x10] sm:$0xff]
    %v38 = vld [vmem:[#allocation3 + $0x18] sm:$0xff]
    %v39 = vld [vmem:[#allocation3 + $0x20] sm:$0xff]
    %v40 = vld [vmem:[#allocation3 + $0x28] sm:$0xff]
    %v41 = vld [vmem:[#allocation3 + $0x30] sm:$0xff]
    %v42 = vld [vmem:[#allocation3 + $0x38] sm:$0xff]
    %v43 = vld [vmem:[#allocation3 + $0x40] sm:$0xff]
    %v44 = vld [vmem:[#allocation3 + $0x48] sm:$0xff]
    %v45 = vld [vmem:[#allocation3 + $0x50] sm:$0xff]
    %v46 = vld [vmem:[#allocation3 + $0x58] sm:$0xff]
    %v47 = vld [vmem:[#allocation3 + $0x60] sm:$0xff]
    %v48 = vld [vmem:[#allocation3 + $0x68] sm:$0xff]
    %v49 = vld [vmem:[#allocation3 + $0x70] sm:$0xff]
    %v50 = vld [vmem:[#allocation3 + $0x78] sm:$0xff]
    %v51 = vld [vmem:[#allocation3 + $0x80] sm:$0xff]
    %v52 = vld [vmem:[#allocation3 + $0x88] sm:$0xff]
    %v53 = vld [vmem:[#allocation3 + $0x90] sm:$0xff]
    %v54 = vld [vmem:[#allocation3 + $0x98] sm:$0xff]
    %v55 = vld [vmem:[#allocation3 + $0xa0] sm:$0xff]
    %v56 = vld [vmem:[#allocation3 + $0xa8] sm:$0xff]
    %v57 = vld [vmem:[#allocation3 + $0xb0] sm:$0xff]
    %v58 = vld [vmem:[#allocation3 + $0xb8] sm:$0xff]
    %v59 = vld [vmem:[#allocation3 + $0xc0] sm:$0xff]
    %v60 = vld [vmem:[#allocation3 + $0xc8] sm:$0xff]
    %v61 = vld [vmem:[#allocation3 + $0xd0] sm:$0xff]
    %v62 = vld [vmem:[#allocation3 + $0xd8] sm:$0xff]
    %v63 = vld [vmem:[#allocation3 + $0xe0] sm:$0xff]
    %v64 = vld [vmem:[#allocation3 + $0xe8] sm:$0xff]
    %v65 = vld [vmem:[#allocation3 + $0xf0] sm:$0xff]
    %v66 = vld [vmem:[#allocation3 + $0xf8] sm:$0xff]
    %v67 = vld [vmem:[%s1] sm:$0xff]
    %v68 = vld [vmem:[%s1 + $0x8] sm:$0xff]
    %v69 = vld [vmem:[%s2] sm:$0x1]
    %v71 = vperm.slane %v69, 0
    %v73 = vmul.f32 %v35, %v71
    %v74 = vmul.f32 %v36, %v71
    %v75 = vmul.f32 %v37, %v71
    %v76 = vmul.f32 %v38, %v71
    %v77 = vmul.f32 %v39, %v71
    %v78 = vmul.f32 %v40, %v71
    %v79 = vmul.f32 %v41, %v71
    %v80 = vmul.f32 %v42, %v71
    %v81 = vmul.f32 %v43, %v71
    %v82 = vmul.f32 %v44, %v71
    %v83 = vmul.f32 %v45, %v71
    %v84 = vmul.f32 %v46, %v71
    %v85 = vmul.f32 %v47, %v71
    %v86 = vmul.f32 %v48, %v71
    %v87 = vmul.f32 %v49, %v71
    %v88 = vmul.f32 %v50, %v71
    %v89 = vmul.f32 %v51, %v71
    %v90 = vmul.f32 %v52, %v71
    %v91 = vmul.f32 %v53, %v71
    %v92 = vmul.f32 %v54, %v71
    %v93 = vmul.f32 %v55, %v71
    %v94 = vmul.f32 %v56, %v71
    %v95 = vmul.f32 %v57, %v71
    %v96 = vmul.f32 %v58, %v71
    %v97 = vmul.f32 %v59, %v71
    %v98 = vmul.f32 %v60, %v71
    %v99 = vmul.f32 %v61, %v71
    %v100 = vmul.f32 %v62, %v71
    %v101 = vmul.f32 %v63, %v71
    %v102 = vmul.f32 %v64, %v71
    %v103 = vmul.f32 %v65, %v71
    %v104 = vmul.f32 %v66, %v71
    %vm105 = vcmask 261120
    %v106 = vsel %vm105, %v73, 0.0
    %107 = vadd.xlane.f32.xlu0 %v106
    %v108 = vpop.xlane.xlu0 %107
    %v109 = vsel %vm105, %v74, 0.0
    %110 = vadd.xlane.f32.xlu0 %v109
    %v111 = vpop.xlane.xlu0 %110
    %v112 = vsel %vm105, %v75, 0.0
    %113 = vadd.xlane.f32.xlu0 %v112
    %v114 = vpop.xlane.xlu0 %113
    %v115 = vsel %vm105, %v76, 0.0
    %116 = vadd.xlane.f32.xlu0 %v115
    %v117 = vpop.xlane.xlu0 %116
    %v118 = vsel %vm105, %v77, 0.0
    %119 = vadd.xlane.f32.xlu0 %v118
    %v120 = vpop.xlane.xlu0 %119
    %v121 = vsel %vm105, %v78, 0.0
    %122 = vadd.xlane.f32.xlu0 %v121
    %v123 = vpop.xlane.xlu0 %122
    %v124 = vsel %vm105, %v79, 0.0
    %125 = vadd.xlane.f32.xlu0 %v124
    %v126 = vpop.xlane.xlu0 %125
    %v127 = vsel %vm105, %v80, 0.0
    %128 = vadd.xlane.f32.xlu0 %v127
    %v129 = vpop.xlane.xlu0 %128
    %v130 = vsel %vm105, %v81, 0.0
    %131 = vadd.xlane.f32.xlu0 %v130
    %v132 = vpop.xlane.xlu0 %131
    %v133 = vsel %vm105, %v82, 0.0
    %134 = vadd.xlane.f32.xlu0 %v133
    %v135 = vpop.xlane.xlu0 %134
    %v136 = vsel %vm105, %v83, 0.0
    %137 = vadd.xlane.f32.xlu0 %v136
    %v138 = vpop.xlane.xlu0 %137
    %v139 = vsel %vm105, %v84, 0.0
    %140 = vadd.xlane.f32.xlu0 %v139
    %v141 = vpop.xlane.xlu0 %140
    %v142 = vsel %vm105, %v85, 0.0
    %143 = vadd.xlane.f32.xlu0 %v142
    %v144 = vpop.xlane.xlu0 %143
    %v145 = vsel %vm105, %v86, 0.0
    %146 = vadd.xlane.f32.xlu0 %v145
    %v147 = vpop.xlane.xlu0 %146
    %v148 = vsel %vm105, %v87, 0.0
    %149 = vadd.xlane.f32.xlu0 %v148
    %v150 = vpop.xlane.xlu0 %149
    %v151 = vsel %vm105, %v88, 0.0
    %152 = vadd.xlane.f32.xlu0 %v151
    %v153 = vpop.xlane.xlu0 %152
    %v154 = vsel %vm105, %v89, 0.0
    %155 = vadd.xlane.f32.xlu0 %v154
    %v156 = vpop.xlane.xlu0 %155
    %v157 = vsel %vm105, %v90, 0.0
    %158 = vadd.xlane.f32.xlu0 %v157
    %v159 = vpop.xlane.xlu0 %158
    %v160 = vsel %vm105, %v91, 0.0
    %161 = vadd.xlane.f32.xlu0 %v160
    %v162 = vpop.xlane.xlu0 %161
    %v163 = vsel %vm105, %v92, 0.0
    %164 = vadd.xlane.f32.xlu0 %v163
    %v165 = vpop.xlane.xlu0 %164
    %v166 = vsel %vm105, %v93, 0.0
    %167 = vadd.xlane.f32.xlu0 %v166
    %v168 = vpop.xlane.xlu0 %167
    %v169 = vsel %vm105, %v94, 0.0
    %170 = vadd.xlane.f32.xlu0 %v169
    %v171 = vpop.xlane.xlu0 %170
    %v172 = vsel %vm105, %v95, 0.0
    %173 = vadd.xlane.f32.xlu0 %v172
    %v174 = vpop.xlane.xlu0 %173
    %v175 = vsel %vm105, %v96, 0.0
    %176 = vadd.xlane.f32.xlu0 %v175
    %v177 = vpop.xlane.xlu0 %176
    %v178 = vsel %vm105, %v97, 0.0
    %179 = vadd.xlane.f32.xlu0 %v178
    %v180 = vpop.xlane.xlu0 %179
    %v181 = vsel %vm105, %v98, 0.0
    %182 = vadd.xlane.f32.xlu0 %v181
    %v183 = vpop.xlane.xlu0 %182
    %v184 = vsel %vm105, %v99, 0.0
    %185 = vadd.xlane.f32.xlu0 %v184
    %v186 = vpop.xlane.xlu0 %185
    %v187 = vsel %vm105, %v100, 0.0
    %188 = vadd.xlane.f32.xlu0 %v187
    %v189 = vpop.xlane.xlu0 %188
    %v190 = vsel %vm105, %v101, 0.0
    %191 = vadd.xlane.f32.xlu0 %v190
    %v192 = vpop.xlane.xlu0 %191
    %v193 = vsel %vm105, %v102, 0.0
    %194 = vadd.xlane.f32.xlu0 %v193
    %v195 = vpop.xlane.xlu0 %194
    %v196 = vsel %vm105, %v103, 0.0
    %197 = vadd.xlane.f32.xlu0 %v196
    %v198 = vpop.xlane.xlu0 %197
    %v199 = vsel %vm105, %v104, 0.0
    %200 = vadd.xlane.f32.xlu0 %v199
    %v201 = vpop.xlane.xlu0 %200
    %s202 = sld [smem:[#allocation2]]
    %v203 = vstv %s202
    %v236 = vlaneseq
    %v237 = vand.u32 %v236, 127
    %v238 = vperm.slane %v108, %v237
    %v239 = vadd.s32 %v237, 4294967288
    %v240 = vperm.slane %v111, %v239
    %vm241 = vcmask 130112
    %v242 = vsel %vm241, %v240, %v238
    %v243 = vperm.slane %v114, %v237
    %v244 = vperm.slane %v117, %v239
    %v245 = vsel %vm241, %v244, %v243
    %v246 = vperm.slane %v120, %v237
    %v247 = vperm.slane %v123, %v239
    %v248 = vsel %vm241, %v247, %v246
    %v249 = vperm.slane %v126, %v237
    %v250 = vperm.slane %v129, %v239
    %v251 = vsel %vm241, %v250, %v249
    %v252 = vperm.slane %v132, %v237
    %v253 = vperm.slane %v135, %v239
    %v254 = vsel %vm241, %v253, %v252
    %v255 = vperm.slane %v138, %v237
    %v256 = vperm.slane %v141, %v239
    %v257 = vsel %vm241, %v256, %v255
    %v258 = vperm.slane %v144, %v237
    %v259 = vperm.slane %v147, %v239
    %v260 = vsel %vm241, %v259, %v258
    %v261 = vperm.slane %v150, %v237
    %v262 = vperm.slane %v153, %v239
    %v263 = vsel %vm241, %v262, %v261
    %v264 = vperm.slane %v156, %v237
    %v265 = vperm.slane %v159, %v239
    %v266 = vsel %vm241, %v265, %v264
    %v267 = vperm.slane %v162, %v237
    %v268 = vperm.slane %v165, %v239
    %v269 = vsel %vm241, %v268, %v267
    %v270 = vperm.slane %v168, %v237
    %v271 = vperm.slane %v171, %v239
    %v272 = vsel %vm241, %v271, %v270
    %v273 = vperm.slane %v174, %v237
    %v274 = vperm.slane %v177, %v239
    %v275 = vsel %vm241, %v274, %v273
    %v276 = vperm.slane %v180, %v237
    %v277 = vperm.slane %v183, %v239
    %v278 = vsel %vm241, %v277, %v276
    %v279 = vperm.slane %v186, %v237
    %v280 = vperm.slane %v189, %v239
    %v281 = vsel %vm241, %v280, %v279
    %v282 = vperm.slane %v192, %v237
    %v283 = vperm.slane %v195, %v239
    %v284 = vsel %vm241, %v283, %v282
    %v285 = vperm.slane %v198, %v237
    %v286 = vperm.slane %v201, %v239
    %v287 = vsel %vm241, %v286, %v285
    %vm288 = vcmask 1041409
    %v289 = vsel %vm288, %v245, %v242
    %vm290 = vcmask 1042434
    %v291 = vsel %vm290, %v248, %v289
    %vm292 = vcmask 1043459
    %v293 = vsel %vm292, %v251, %v291
    %vm294 = vcmask 1044484
    %v295 = vsel %vm294, %v254, %v293
    %vm296 = vcmask 1045509
    %v297 = vsel %vm296, %v257, %v295
    %vm298 = vcmask 1046534
    %v299 = vsel %vm298, %v260, %v297
    %vm300 = vcmask 1047559
    %v301 = vsel %vm300, %v263, %v299
    %v302 = vsel %vm288, %v269, %v266
    %v303 = vsel %vm290, %v272, %v302
    %v304 = vsel %vm292, %v275, %v303
    %v305 = vsel %vm294, %v278, %v304
    %v306 = vsel %vm296, %v281, %v305
    %v307 = vsel %vm298, %v284, %v306
    %v308 = vsel %vm300, %v287, %v307
    %vm309 = vcmask 130048
    %v310 = vsel %vm309, %v301, 0
    %v312 = vsel %vm309, %v308, 0
    %314 = vmatpush.msra.mxu0 0.0
    %315 = vmatpush.msra.mxu0 0.0
    %316 = vmatpush.msra.mxu0 0.0
    %317 = vmatpush.msra.mxu0 0.0
    %318 = vmatpush.msra.mxu0 0.0
    %319 = vmatpush.msra.mxu0 0.0
    %320 = vmatpush.msra.mxu0 0.0
    %321 = vmatpush.msra.mxu0 0.0
    %322 = vmatpush.msra.mxu0 0.0
    %323 = vmatpush.msra.mxu0 0.0
    %324 = vmatpush.msra.mxu0 0.0
    %325 = vmatpush.msra.mxu0 0.0
    %326 = vmatpush.msra.mxu0 0.0
    %327 = vmatpush.msra.mxu0 0.0
    %328 = vmatpush.msra.mxu0 %v68
    %329 = vmatpush.msra.mxu0 %v67
    %330 = vmatmul.f32.gmra.mxu0 %v310
    %v331 = vpop.f32.mrf.mxu0
    %v332 = vadd.f32 %v203, %v331
    %333 = vmatmul.f32.gmra.mxu0 %v312
    %v334 = vpop.f32.mrf.mxu0
    %v335 = vadd.f32 %v203, %v334
    %336 = vdwg.mxu0
    %337 = vst.msk [vmem:[#allocation6] sm:$0xff] %vm309, %v332
    %338 = vst.msk [vmem:[#allocation6 + $0x8] sm:$0xff] %vm309, %v335
    // Predicated region
    $region22: #{gcn_forward.1} parent=1 // pred_check
      _
    $region23: #{gcn_forward.1} parent=1 // pred_check_branch
      %340 = sbr.rel (0) target = $region25
    $region24: #{gcn_forward.1} parent=1 // pred_region
      %342 = vsyncadd [#allocation5], 0
      %s343 = sshll.u32 [#allocation6], 4
      %s344 = int_to_ptr.vmem [resolvable:$true] %s343
      %s345 = sshll.u32 %s4, 4
      %s346 = int_to_ptr.hbm [resolvable:$true] %s345
      %351 = dma.vmem_to_hbm [thread:$0]  %s344, 256, %s346, [#allocation5], 128, 128, 8
    $region25: #{gcn_forward.1} parent=1 // pred_fallthru
      _
    // Predicated region
    $region26: #{gcn_forward.1} parent=1 // pred_check
      _
    $region27: #{gcn_forward.1} parent=1 // pred_check_branch
      %353 = sbr.rel (0) target = $region29
    $region28: #{gcn_forward.1} parent=1 // pred_region
      %355 = dma.done [#allocation5], 256
    $region29: #{gcn_forward.1} parent=1 // pred_fallthru
      _
    %356 = vsyncpa [#allocation4], 1
    %357 = vsyncpa [#allocation5], 1

</llo_original>
